<compile_context>
chip_gen: v7x
topology: tpu7x:2x2x1
jax: 0.10.0
libtpu: 0.0.40
codegen_flags: <defaults>
</compile_context>

<pallas_src>
import functools

import jax
import jax.numpy as jnp
from jax import lax
from jax.experimental import pallas as pl
from jax.experimental.pallas import tpu as pltpu


def _dice_partial_kernel(pred_ref, tgt_ref, inter_ref, denom_ref,
                         inter_acc, denom_acc, *,
                         kps, tile_d, d, k_mask_from, need_mask, hoist):
    """Grid = (batch tiles, D splits, D tiles per split).

    Accumulates per-row sum(pred*target) and sum(pred)+sum(target) over the
    D tiles owned by this (batch tile, split) pair and writes them out as
    partial sums on the last D tile of the split.  Out-of-range feature lanes
    (cdiv tail tile, or a clamped duplicate tile of an uneven split) are
    masked before accumulation; out-of-range batch rows are harmless garbage
    that the wrapper slices off.
    """
    s = pl.program_id(1)
    k = pl.program_id(2)

    @pl.when(k == 0)
    def _init():
        inter_acc[...] = jnp.zeros_like(inter_acc)
        denom_acc[...] = jnp.zeros_like(denom_acc)

    o = pred_ref[...].astype(jnp.float32)
    t = tgt_ref[...].astype(jnp.float32)
    tn = o.shape[0]

    def accumulate(masked):
        start = (s * kps + k) * tile_d if masked else None  # unclamped offset
        acc_i = inter_acc[...]
        acc_d = denom_acc[...]
        if hoist:
            # Lane-resident (tn, 128) accumulators: per-chunk VPU adds each
            # step; the single cross-lane (XLU) reduce happens in finalize.
            lane = None
            if masked:
                lane = lax.broadcasted_iota(jnp.int32, (tn, 128), 1)
            for g in range(tile_d // 128):
                sl = slice(g * 128, (g + 1) * 128)
                o_g = o[:, sl]
                t_g = t[:, sl]
                io_g = o_g * t_g
                dn_g = o_g + t_g
                if masked:
                    valid = (start + g * 128 + lane) < d
                    io_g = jnp.where(valid, io_g, 0.0)
                    dn_g = jnp.where(valid, dn_g, 0.0)
                acc_i = acc_i + io_g
                acc_d = acc_d + dn_g
        else:
            io = o * t
            dn = o + t
            if masked:
                lane = lax.broadcasted_iota(jnp.int32, o.shape, 1)
                valid = (start + lane) < d
                io = jnp.where(valid, io, 0.0)
                dn = jnp.where(valid, dn, 0.0)
            acc_i = acc_i + jnp.sum(io, axis=1, keepdims=True)
            acc_d = acc_d + jnp.sum(dn, axis=1, keepdims=True)
        inter_acc[...] = acc_i
        denom_acc[...] = acc_d

    if not need_mask:
        accumulate(False)
    else:
        tail = (s * kps + k) >= k_mask_from

        @pl.when(tail)
        def _masked():
            accumulate(True)

        @pl.when(jnp.logical_not(tail))
        def _unmasked():
            accumulate(False)

    @pl.when(k == kps - 1)
    def _finalize():
        if hoist:
            inter_ref[...] = jnp.sum(inter_acc[...], axis=1, keepdims=True)[None]
            denom_ref[...] = jnp.sum(denom_acc[...], axis=1, keepdims=True)[None]
        else:
            inter_ref[...] = inter_acc[...][None]
            denom_ref[...] = denom_acc[...][None]


def _choose_tiles(n, d, block_budget_bytes):
    """Pick (tn, tile_d) for one input block within `block_budget_bytes`.

    tn: batch tile — full n when n <= 8, else a capped multiple of 8 (the
        batch axis uses a cdiv grid; tail rows are sliced off in the wrapper).
    tile_d: feature tile — a 128-multiple sized to the budget (cdiv grid +
        in-kernel lane masking on the tail), or the exact full D when the
        whole feature dim fits in one tile (full-dim block: no masking).
    Budgets account for sublane padding (rows rounded up to 8 in VMEM).
    """
    d_pad = ((d + 127) // 128) * 128
    max_elems = max(block_budget_bytes // 4, 8 * 128)

    if n <= 8:
        tn = n
    else:
        tn = min((n // 8) * 8, 256)
    tn_eff = ((tn + 7) // 8) * 8

    tile_d = min(d_pad, max(128, ((max_elems // tn_eff) // 128) * 128))

    if tile_d >= d_pad:
        # Whole feature dim in one tile: use the exact size and spend any
        # leftover budget on a bigger batch tile instead.
        tile_d = d
        if n > tn:
            grow = ((max_elems // d_pad) // 8) * 8
            if grow > tn:
                tn = max(tn, min((n // 8) * 8, grow, 1024))
    return tn, tile_d


def dice_loss(output, target, _block_budget_bytes=None):
    """Pallas TPU dice loss.  output/target: (N, D) arrays -> scalar f32."""
    assert output.shape == target.shape and output.ndim == 2
    n, d = output.shape

    try:
        vmem_cap = int(pltpu.get_tpu_info().vmem_capacity_bytes)
    except Exception:
        vmem_cap = 64 << 20  # conservative (v7x-sized) default

    if _block_budget_bytes is None:
        # ~10.6 MiB/block on v7x (64 MiB VMEM), capped at 16 MiB on v5e/v6e.
        block_budget = int(min(16 << 20, max(4 << 20, vmem_cap // 6)))
    else:
        block_budget = int(_block_budget_bytes)

    tn, tile_d = _choose_tiles(n, d, block_budget)
    tn_eff = ((tn + 7) // 8) * 8

    n_tiles = -(-n // tn)
    k_total = -(-d // tile_d)

    # Split the D reduction across a second "parallel" axis when the batch
    # grid has a single step, so both v7x TensorCores get work.  On 1-TC chips
    # the only cost is one redundant (fully masked) tail tile when k_total is
    # odd, so gate on even / large tile counts to bound that overhead.
    n_split = 2 if (n_tiles == 1 and k_total >= 2
                    and (k_total % 2 == 0 or k_total >= 8)) else 1
    kps = -(-k_total // n_split)

    need_mask = (d % tile_d != 0) or (n_split * kps != k_total)
    k_mask_from = (d // tile_d) if (d % tile_d != 0) else k_total

    # Hoisted (tn, 128) accumulation only when the unroll stays small and the
    # tile is 128-aligned; otherwise fall back to a per-step lane reduction.
    hoist = (tile_d % 128 == 0) and (tile_d // 128 <= 64)
    acc_shape = (tn, 128) if hoist else (tn, 1)

    if n_split * kps == k_total:
        def in_map(i, s, k):
            return (i, s * kps + k)
    else:
        def in_map(i, s, k):
            return (i, jnp.minimum(s * kps + k, k_total - 1))

    def out_map(i, s, k):
        return (s, i, 0)

    # Explicit VMEM budget: 2 inputs x 2 pipeline buffers + outputs + scratch
    # (+ slop).  Stays within 64 MiB on v7x and well under 128 MiB on v5e/v6e.
    block_vmem = tn_eff * tile_d * 4
    out_vmem = 2 * 2 * (tn_eff * 128 * 4)
    scratch_vmem = 2 * (tn_eff * 128 * 4)
    vmem_limit = int(max(4 * block_vmem + out_vmem + scratch_vmem + (4 << 20),
                         32 << 20))

    kernel = functools.partial(
        _dice_partial_kernel, kps=kps, tile_d=tile_d, d=d,
        k_mask_from=k_mask_from, need_mask=need_mask, hoist=hoist)

    n_pad = n_tiles * tn
    inter_parts, denom_parts = pl.pallas_call(
        kernel,
        out_shape=[jax.ShapeDtypeStruct((n_split, n_pad, 1), jnp.float32),
                   jax.ShapeDtypeStruct((n_split, n_pad, 1), jnp.float32)],
        grid_spec=pltpu.PrefetchScalarGridSpec(
            num_scalar_prefetch=0,
            grid=(n_tiles, n_split, kps),
            in_specs=[pl.BlockSpec((tn, tile_d), in_map),
                      pl.BlockSpec((tn, tile_d), in_map)],
            out_specs=[pl.BlockSpec((1, tn, 1), out_map),
                       pl.BlockSpec((1, tn, 1), out_map)],
            scratch_shapes=[pltpu.VMEM(acc_shape, jnp.float32),
                            pltpu.VMEM(acc_shape, jnp.float32)],
        ),
        compiler_params=pltpu.CompilerParams(
            dimension_semantics=("parallel", "parallel", "arbitrary"),
            vmem_limit_bytes=vmem_limit,
        ),
    )(output, target)

    # Combine split partials, drop padded tail rows (NEVER sum them: with
    # smooth=1 an all-zero row would contribute 2.0), then the O(N) epilogue.
    inter = jnp.sum(inter_parts, axis=0)[:n, 0]
    denom = jnp.sum(denom_parts, axis=0)[:n, 0]
    smooth = jnp.float32(1.0)
    score = 2.0 * (inter + smooth) / (denom + smooth)
    return 100.0 * (1.0 - jnp.sum(score) / jnp.float32(n))


def dice_loss_ref(output, target):
    """Pure-JAX reference mirroring the PyTorch forward."""
    smooth = 1.0
    num = target.shape[0]
    output = output.astype(jnp.float32)
    target = target.astype(jnp.float32)
    intersect = output * target
    score = 2.0 * (intersect.sum(1) + smooth) / (output.sum(1) + target.sum(1) + smooth)
    return 100.0 * (1.0 - score.sum() / num)


def _make_inputs(key, n, d):
    k1, k2 = jax.random.split(key)
    pred = jax.nn.sigmoid(jax.random.normal(k1, (n, d), dtype=jnp.float32))
    tgt = (jax.random.uniform(k2, (n, d), dtype=jnp.float32) > 0.5).astype(jnp.float32)
    return pred, tgt


if __name__ == "__main__":
    key = jax.random.PRNGKey(0)

    # Primary example consistent with a segmentation use-case: batch=2,
    # flattened probability / mask maps of size 4*16*16 = 1024 per example.
    N, D = 2, 4 * 16 * 16
    key, sub = jax.random.split(key)
    pred, tgt = _make_inputs(sub, N, D)
    loss = jax.block_until_ready(dice_loss(pred, tgt))
    ref = dice_loss_ref(pred, tgt)
    assert jnp.allclose(loss, ref, rtol=2e-5, atol=1e-3), (loss, ref)

    # Extra small cases exercising every kernel path (cdiv tail masking,
    # 2-way D split with and without a clamped duplicate tile, batch tail
    # slicing, and the non-hoisted wide-tile fallback).
    extra_cases = [
        dict(n=2, d=1000, budget=4096),     # split=2, masked tail, no clamp
        dict(n=2, d=1100, budget=4096),     # split=2, clamped duplicate tile
        dict(n=10, d=1000, budget=None),    # batch tail rows sliced off
        dict(n=2, d=20000, budget=266240),  # wide-tile fallback + masked tail
    ]
    for case in extra_cases:
        key, sub = jax.random.split(key)
        pred, tgt = _make_inputs(sub, case["n"], case["d"])
        got = jax.block_until_ready(
            dice_loss(pred, tgt, _block_budget_bytes=case["budget"]))
        want = dice_loss_ref(pred, tgt)
        assert jnp.allclose(got, want, rtol=2e-5, atol=1e-3), (case, got, want)

    print("KERNEL_OK")
</pallas_src>

<mosaic_0001>
module attributes {stable_mosaic.version = 11 : i64} {
  func.func @_dice_partial_kernel(%arg0: i32, %arg1: i32, %arg2: i32, %arg3: memref<2x1024xf32, #tpu.memory_space<vmem>>, %arg4: memref<2x1024xf32, #tpu.memory_space<vmem>>, %arg5: memref<1x2x1xf32, #tpu.memory_space<vmem>>, %arg6: memref<1x2x1xf32, #tpu.memory_space<vmem>>, %arg7: memref<2x128xf32, #tpu.memory_space<vmem>>, %arg8: memref<2x128xf32, #tpu.memory_space<vmem>>) attributes {dimension_semantics = [#tpu.dimension_semantics<parallel>, #tpu.dimension_semantics<parallel>, #tpu.dimension_semantics<arbitrary>], iteration_bounds = array<i64: 1, 1, 1>, scalar_prefetch = 0 : i64, scratch_operands = 2 : i64, tpu.core_type = #tpu.core_type<tc>, window_params = [{transform_indices = @transform_0, window_bounds = array<i64: 2, 1024>}, {transform_indices = @transform_1, window_bounds = array<i64: 2, 1024>}, {transform_indices = @transform_2, window_bounds = array<i64: 1, 2, 1>}, {transform_indices = @transform_3, window_bounds = array<i64: 1, 2, 1>}]} {
    %c0_i32 = arith.constant 0 : i32
    %0 = arith.cmpi eq, %arg2, %c0_i32 : i32
    %1 = arith.extui %0 : i1 to i32
    %c0_i32_0 = arith.constant 0 : i32
    %2 = arith.cmpi ne, %1, %c0_i32_0 : i32
    scf.if %2 {
      %cst = arith.constant 0.000000e+00 : f32
      %60 = vector.broadcast %cst : f32 to vector<2x128xf32>
      %c0_14 = arith.constant 0 : index
      %c0_15 = arith.constant 0 : index
      %61 = vector.load %arg7[%c0_14, %c0_15] : memref<2x128xf32, #tpu.memory_space<vmem>>, vector<2x128xf32>
      tpu.vector_store %arg7[%c0_14, %c0_15], %60 {strides = array<i32>} : memref<2x128xf32, #tpu.memory_space<vmem>>, vector<2x128xf32>,
      %cst_16 = arith.constant 0.000000e+00 : f32
      %62 = vector.broadcast %cst_16 : f32 to vector<2x128xf32>
      %c0_17 = arith.constant 0 : index
      %c0_18 = arith.constant 0 : index
      %63 = vector.load %arg8[%c0_17, %c0_18] : memref<2x128xf32, #tpu.memory_space<vmem>>, vector<2x128xf32>
      tpu.vector_store %arg8[%c0_17, %c0_18], %62 {strides = array<i32>} : memref<2x128xf32, #tpu.memory_space<vmem>>, vector<2x128xf32>,
    } else {
    }
    %c0 = arith.constant 0 : index
    %c0_1 = arith.constant 0 : index
    %3 = vector.load %arg3[%c0, %c0_1] : memref<2x1024xf32, #tpu.memory_space<vmem>>, vector<2x1024xf32>
    %c0_2 = arith.constant 0 : index
    %c0_3 = arith.constant 0 : index
    %4 = vector.load %arg4[%c0_2, %c0_3] : memref<2x1024xf32, #tpu.memory_space<vmem>>, vector<2x1024xf32>
    %c0_4 = arith.constant 0 : index
    %c0_5 = arith.constant 0 : index
    %5 = vector.load %arg7[%c0_4, %c0_5] : memref<2x128xf32, #tpu.memory_space<vmem>>, vector<2x128xf32>
    %c0_6 = arith.constant 0 : index
    %c0_7 = arith.constant 0 : index
    %6 = vector.load %arg8[%c0_6, %c0_7] : memref<2x128xf32, #tpu.memory_space<vmem>>, vector<2x128xf32>
    %7 = vector.extract_strided_slice %3 {offsets = [0, 0], sizes = [2, 128], strides = [1, 1]} : vector<2x1024xf32> to vector<2x128xf32>
    %8 = vector.extract_strided_slice %4 {offsets = [0, 0], sizes = [2, 128], strides = [1, 1]} : vector<2x1024xf32> to vector<2x128xf32>
    %9 = arith.mulf %7, %8 : vector<2x128xf32>
    %10 = arith.addf %7, %8 : vector<2x128xf32>
    %11 = arith.addf %5, %9 : vector<2x128xf32>
    %12 = arith.addf %6, %10 : vector<2x128xf32>
    %13 = vector.extract_strided_slice %3 {offsets = [0, 128], sizes = [2, 128], strides = [1, 1]} : vector<2x1024xf32> to vector<2x128xf32>
    %14 = vector.extract_strided_slice %4 {offsets = [0, 128], sizes = [2, 128], strides = [1, 1]} : vector<2x1024xf32> to vector<2x128xf32>
    %15 = arith.mulf %13, %14 : vector<2x128xf32>
    %16 = arith.addf %13, %14 : vector<2x128xf32>
    %17 = arith.addf %11, %15 : vector<2x128xf32>
    %18 = arith.addf %12, %16 : vector<2x128xf32>
    %19 = vector.extract_strided_slice %3 {offsets = [0, 256], sizes = [2, 128], strides = [1, 1]} : vector<2x1024xf32> to vector<2x128xf32>
    %20 = vector.extract_strided_slice %4 {offsets = [0, 256], sizes = [2, 128], strides = [1, 1]} : vector<2x1024xf32> to vector<2x128xf32>
    %21 = arith.mulf %19, %20 : vector<2x128xf32>
    %22 = arith.addf %19, %20 : vector<2x128xf32>
    %23 = arith.addf %17, %21 : vector<2x128xf32>
    %24 = arith.addf %18, %22 : vector<2x128xf32>
    %25 = vector.extract_strided_slice %3 {offsets = [0, 384], sizes = [2, 128], strides = [1, 1]} : vector<2x1024xf32> to vector<2x128xf32>
    %26 = vector.extract_strided_slice %4 {offsets = [0, 384], sizes = [2, 128], strides = [1, 1]} : vector<2x1024xf32> to vector<2x128xf32>
    %27 = arith.mulf %25, %26 : vector<2x128xf32>
    %28 = arith.addf %25, %26 : vector<2x128xf32>
    %29 = arith.addf %23, %27 : vector<2x128xf32>
    %30 = arith.addf %24, %28 : vector<2x128xf32>
    %31 = vector.extract_strided_slice %3 {offsets = [0, 512], sizes = [2, 128], strides = [1, 1]} : vector<2x1024xf32> to vector<2x128xf32>
    %32 = vector.extract_strided_slice %4 {offsets = [0, 512], sizes = [2, 128], strides = [1, 1]} : vector<2x1024xf32> to vector<2x128xf32>
    %33 = arith.mulf %31, %32 : vector<2x128xf32>
    %34 = arith.addf %31, %32 : vector<2x128xf32>
    %35 = arith.addf %29, %33 : vector<2x128xf32>
    %36 = arith.addf %30, %34 : vector<2x128xf32>
    %37 = vector.extract_strided_slice %3 {offsets = [0, 640], sizes = [2, 128], strides = [1, 1]} : vector<2x1024xf32> to vector<2x128xf32>
    %38 = vector.extract_strided_slice %4 {offsets = [0, 640], sizes = [2, 128], strides = [1, 1]} : vector<2x1024xf32> to vector<2x128xf32>
    %39 = arith.mulf %37, %38 : vector<2x128xf32>
    %40 = arith.addf %37, %38 : vector<2x128xf32>
    %41 = arith.addf %35, %39 : vector<2x128xf32>
    %42 = arith.addf %36, %40 : vector<2x128xf32>
    %43 = vector.extract_strided_slice %3 {offsets = [0, 768], sizes = [2, 128], strides = [1, 1]} : vector<2x1024xf32> to vector<2x128xf32>
    %44 = vector.extract_strided_slice %4 {offsets = [0, 768], sizes = [2, 128], strides = [1, 1]} : vector<2x1024xf32> to vector<2x128xf32>
    %45 = arith.mulf %43, %44 : vector<2x128xf32>
    %46 = arith.addf %43, %44 : vector<2x128xf32>
    %47 = arith.addf %41, %45 : vector<2x128xf32>
    %48 = arith.addf %42, %46 : vector<2x128xf32>
    %49 = vector.extract_strided_slice %3 {offsets = [0, 896], sizes = [2, 128], strides = [1, 1]} : vector<2x1024xf32> to vector<2x128xf32>
    %50 = vector.extract_strided_slice %4 {offsets = [0, 896], sizes = [2, 128], strides = [1, 1]} : vector<2x1024xf32> to vector<2x128xf32>
    %51 = arith.mulf %49, %50 : vector<2x128xf32>
    %52 = arith.addf %49, %50 : vector<2x128xf32>
    %53 = arith.addf %47, %51 : vector<2x128xf32>
    %54 = arith.addf %48, %52 : vector<2x128xf32>
    %c0_8 = arith.constant 0 : index
    %c0_9 = arith.constant 0 : index
    %55 = vector.load %arg7[%c0_8, %c0_9] : memref<2x128xf32, #tpu.memory_space<vmem>>, vector<2x128xf32>
    tpu.vector_store %arg7[%c0_8, %c0_9], %53 {strides = array<i32>} : memref<2x128xf32, #tpu.memory_space<vmem>>, vector<2x128xf32>,
    %c0_10 = arith.constant 0 : index
    %c0_11 = arith.constant 0 : index
    %56 = vector.load %arg8[%c0_10, %c0_11] : memref<2x128xf32, #tpu.memory_space<vmem>>, vector<2x128xf32>
    tpu.vector_store %arg8[%c0_10, %c0_11], %54 {strides = array<i32>} : memref<2x128xf32, #tpu.memory_space<vmem>>, vector<2x128xf32>,
    %c0_i32_12 = arith.constant 0 : i32
    %57 = arith.cmpi eq, %arg2, %c0_i32_12 : i32
    %58 = arith.extui %57 : i1 to i32
    %c0_i32_13 = arith.constant 0 : i32
    %59 = arith.cmpi ne, %58, %c0_i32_13 : i32
    scf.if %59 {
      %c0_14 = arith.constant 0 : index
      %c0_15 = arith.constant 0 : index
      %60 = vector.load %arg7[%c0_14, %c0_15] : memref<2x128xf32, #tpu.memory_space<vmem>>, vector<2x128xf32>
      %cst = arith.constant dense<0.000000e+00> : vector<2xf32>
      %61 = vector.multi_reduction <add>, %60, %cst [1] : vector<2x128xf32> to vector<2xf32>
      %62 = vector.shape_cast %61 : vector<2xf32> to vector<2x1xf32>
      %63 = vector.shape_cast %62 : vector<2x1xf32> to vector<1x2x1xf32>
      %c0_16 = arith.constant 0 : index
      %c0_17 = arith.constant 0 : index
      %c0_18 = arith.constant 0 : index
      %64 = vector.load %arg5[%c0_16, %c0_17, %c0_18] : memref<1x2x1xf32, #tpu.memory_space<vmem>>, vector<1x2x1xf32>
      tpu.vector_store %arg5[%c0_16, %c0_17, %c0_18], %63 {strides = array<i32>} : memref<1x2x1xf32, #tpu.memory_space<vmem>>, vector<1x2x1xf32>,
      %c0_19 = arith.constant 0 : index
      %c0_20 = arith.constant 0 : index
      %65 = vector.load %arg8[%c0_19, %c0_20] : memref<2x128xf32, #tpu.memory_space<vmem>>, vector<2x128xf32>
      %cst_21 = arith.constant dense<0.000000e+00> : vector<2xf32>
      %66 = vector.multi_reduction <add>, %65, %cst_21 [1] : vector<2x128xf32> to vector<2xf32>
      %67 = vector.shape_cast %66 : vector<2xf32> to vector<2x1xf32>
      %68 = vector.shape_cast %67 : vector<2x1xf32> to vector<1x2x1xf32>
      %c0_22 = arith.constant 0 : index
      %c0_23 = arith.constant 0 : index
      %c0_24 = arith.constant 0 : index
      %69 = vector.load %arg6[%c0_22, %c0_23, %c0_24] : memref<1x2x1xf32, #tpu.memory_space<vmem>>, vector<1x2x1xf32>
      tpu.vector_store %arg6[%c0_22, %c0_23, %c0_24], %68 {strides = array<i32>} : memref<1x2x1xf32, #tpu.memory_space<vmem>>, vector<1x2x1xf32>,
    } else {
    }
    return
  }
  func.func @transform_0(%arg0: i32, %arg1: i32, %arg2: i32) -> (i32, i32) {
    %c1_i32 = arith.constant 1 : i32
    %0 = arith.muli %arg1, %c1_i32 : i32
    %1 = arith.addi %0, %arg2 : i32
    %c0_i32 = arith.constant 0 : i32
    return %arg0, %1 : i32, i32
  }
  func.func @transform_1(%arg0: i32, %arg1: i32, %arg2: i32) -> (i32, i32) {
    %c1_i32 = arith.constant 1 : i32
    %0 = arith.muli %arg1, %c1_i32 : i32
    %1 = arith.addi %0, %arg2 : i32
    %c0_i32 = arith.constant 0 : i32
    return %arg0, %1 : i32, i32
  }
  func.func @transform_2(%arg0: i32, %arg1: i32, %arg2: i32) -> (i32, i32, i32) {
    %c0_i32 = arith.constant 0 : i32
    %c0_i32_0 = arith.constant 0 : i32
    return %arg1, %arg0, %c0_i32 : i32, i32, i32
  }
  func.func @transform_3(%arg0: i32, %arg1: i32, %arg2: i32) -> (i32, i32, i32) {
    %c0_i32 = arith.constant 0 : i32
    %c0_i32_0 = arith.constant 0 : i32
    return %arg1, %arg0, %c0_i32 : i32, i32, i32
  }
}

</mosaic_0001>

<llo_original>
// kernel: tpu_custom_call.1
$region0: #{tpu_custom_call.1}
  #allocation0 [shape = 'u32[]', space=smem, size = 0x4, offset = 0x4, fixed_abs, tag = 'smem constant byte address 0x4 - core index']
  #allocation1 [shape = 'u32[144,128]{1,0:T(1,128)}', space=vmem, size = 0x12000, scoped, tag = 'internal scratch']
  #allocation2 [shape = 'f32[2,128]{1,0:T(2,128)}', space=vmem, size = 0x400, scoped, tag = 'scratch operand']
  #allocation3 [shape = 'f32[2,128]{1,0:T(2,128)}', space=vmem, size = 0x400, scoped, tag = 'scratch operand']
  %s0 = inlined_call_operand.hbm [shape: f32[2,1024], index: 0, kind: input, shape index: {}]
  %s1 = inlined_call_operand.hbm [shape: f32[2,1024], index: 1, kind: input, shape index: {}]
  %s2 = inlined_call_operand.vmem [shape: f32[1,2,1], index: 2, kind: output, shape index: {0}]
  %s3 = inlined_call_operand.vmem [shape: f32[1,2,1], index: 3, kind: output, shape index: {1}]
  %4 = xla_tuple %s2, %s3
  %s5 = sld [smem:[#allocation0]]
  $region42: #{tpu_custom_call.1} parent=0
    _
  %s7 = ssub.s32 1, %s5
  %s8 = scalar_select 0, %s7, %s5
  $region1: #{tpu_custom_call.1} parent=0
    #allocation4 [shape = 'u8[8192]{0}', space=vmem, size = 0x2000, scoped, tag = 'input window, operand 0, single buffered']
    #allocation5 [shape = 's32[1]{0}', space=sflag, size = 0x4, scoped, tag = 'scoped memory for tpu_custom_call.1']
    #allocation6 [shape = 'u8[8192]{0}', space=vmem, size = 0x2000, scoped, tag = 'input window, operand 1, single buffered']
    #allocation7 [shape = 's32[1]{0}', space=sflag, size = 0x4, scoped, tag = 'scoped memory for tpu_custom_call.1']
    %9 = vsyncpa [#allocation5], 0
    %10 = vsyncpa [#allocation7], 0
    // Predicated region
    $region2: #{tpu_custom_call.1} parent=1 // pred_check
      _
    $region3: #{tpu_custom_call.1} parent=1 // pred_check_branch
      %12 = sbr.rel (0) target = $region5
    $region4: #{tpu_custom_call.1} parent=1 // pred_region
      %s13 = sadd.s32 0, 0
      %s14 = smul.u32 8, %s13
      %s16 = ssub.s32 256, 256
      %17 = vsyncadd [#allocation5], %s16
      %s18 = smul.addr %s14, 32
      %s19 = scalar_lea.hbm %s0, %s18
      %s21 = sshll.u32 [#allocation4], 4
      %s22 = int_to_ptr.vmem [resolvable:$true] %s21
      %24 = dma.hbm_to_vmem [thread:$0]  %s19, 256, %s22, [#allocation5]
    $region5: #{tpu_custom_call.1} parent=1 // pred_fallthru
      _
    // Predicated region
    $region6: #{tpu_custom_call.1} parent=1 // pred_check
      _
    $region7: #{tpu_custom_call.1} parent=1 // pred_check_branch
      %26 = sbr.rel (0) target = $region9
    $region8: #{tpu_custom_call.1} parent=1 // pred_region
      %s27 = sadd.s32 0, 0
      %s28 = smul.u32 8, %s27
      %s30 = ssub.s32 256, 256
      %31 = vsyncadd [#allocation7], %s30
      %s32 = smul.addr %s28, 32
      %s33 = scalar_lea.hbm %s1, %s32
      %s35 = sshll.u32 [#allocation6], 4
      %s36 = int_to_ptr.vmem [resolvable:$true] %s35
      %38 = dma.hbm_to_vmem [thread:$0]  %s33, 256, %s36, [#allocation7]
    $region9: #{tpu_custom_call.1} parent=1 // pred_fallthru
      _
    // Predicated region
    $region10: #{tpu_custom_call.1} parent=1 // pred_check
      _
    $region11: #{tpu_custom_call.1} parent=1 // pred_check_branch
      %40 = sbr.rel (0) target = $region13
    $region12: #{tpu_custom_call.1} parent=1 // pred_region
      %41 = dma.done [#allocation5], 256
    $region13: #{tpu_custom_call.1} parent=1 // pred_fallthru
      _
    // Predicated region
    $region14: #{tpu_custom_call.1} parent=1 // pred_check
      _
    $region15: #{tpu_custom_call.1} parent=1 // pred_check_branch
      %43 = sbr.rel (0) target = $region17
    $region16: #{tpu_custom_call.1} parent=1 // pred_region
      %44 = dma.done [#allocation7], 256
    $region17: #{tpu_custom_call.1} parent=1 // pred_fallthru
      _
    %s45 = sadd.s32 0, 0
    %s46 = smul.u32 8, %s45
    %s47 = sadd.s32 0, 0
    %s48 = smul.u32 8, %s47
    %p49 = scmp.eq.s32.totalorder 0, 0
    // Predicated region
    $region18: #{tpu_custom_call.1} parent=1 // pred_check
      %p50 = pneg %p49
    $region19: #{tpu_custom_call.1} parent=1 // pred_check_branch
      %52 = sbr.rel (%p50) target = $region21
    $region20: #{tpu_custom_call.1} parent=1 // pred_region
      %53 = vst [vmem:[#allocation2] sm:$0x3] 0.0
      %54 = vst [vmem:[#allocation3] sm:$0x3] 0.0
    $region21: #{tpu_custom_call.1} parent=1 // pred_fallthru
      _
    %v55 = vld [vmem:[#allocation4] sm:$0xff]
    %v56 = vld [vmem:[#allocation4 + $0x8] sm:$0xff]
    %v57 = vld [vmem:[#allocation6] sm:$0xff]
    %v58 = vld [vmem:[#allocation6 + $0x8] sm:$0xff]
    %v59 = vld [vmem:[#allocation2] sm:$0x3]
    %v60 = vld [vmem:[#allocation3] sm:$0x3]
    %v61 = vmul.f32 %v55, %v57
    %v62 = vadd.f32 %v55, %v57
    %v63 = vadd.f32 %v59, %v61
    %v64 = vadd.f32 %v60, %v62
    %v66 = vrot.slane %v55, 2
    %v69 = vrot.slane %v57, 2
    %v71 = vmul.f32 %v66, %v69
    %v72 = vadd.f32 %v66, %v69
    %v73 = vadd.f32 %v63, %v71
    %v74 = vadd.f32 %v64, %v72
    %v75 = vrot.slane %v55, 4
    %v77 = vrot.slane %v57, 4
    %v79 = vmul.f32 %v75, %v77
    %v80 = vadd.f32 %v75, %v77
    %v81 = vadd.f32 %v73, %v79
    %v82 = vadd.f32 %v74, %v80
    %v83 = vrot.slane %v55, 6
    %v85 = vrot.slane %v57, 6
    %v87 = vmul.f32 %v83, %v85
    %v88 = vadd.f32 %v83, %v85
    %v89 = vadd.f32 %v81, %v87
    %v90 = vadd.f32 %v82, %v88
    %v91 = vmul.f32 %v56, %v58
    %v92 = vadd.f32 %v56, %v58
    %v93 = vadd.f32 %v89, %v91
    %v94 = vadd.f32 %v90, %v92
    %v96 = vrot.slane %v56, 2
    %v99 = vrot.slane %v58, 2
    %v101 = vmul.f32 %v96, %v99
    %v102 = vadd.f32 %v96, %v99
    %v103 = vadd.f32 %v93, %v101
    %v104 = vadd.f32 %v94, %v102
    %v105 = vrot.slane %v56, 4
    %v107 = vrot.slane %v58, 4
    %v109 = vmul.f32 %v105, %v107
    %v110 = vadd.f32 %v105, %v107
    %v111 = vadd.f32 %v103, %v109
    %v112 = vadd.f32 %v104, %v110
    %v113 = vrot.slane %v56, 6
    %v115 = vrot.slane %v58, 6
    %v117 = vmul.f32 %v113, %v115
    %v118 = vadd.f32 %v113, %v115
    %v119 = vadd.f32 %v111, %v117
    %v120 = vadd.f32 %v112, %v118
    %121 = vst [vmem:[#allocation2] sm:$0x3] %v119
    %122 = vst [vmem:[#allocation3] sm:$0x3] %v120
    // Predicated region
    $region22: #{tpu_custom_call.1} parent=1 // pred_check
      %p123 = pneg %p49
    $region23: #{tpu_custom_call.1} parent=1 // pred_check_branch
      %125 = sbr.rel (%p123) target = $region25
    $region24: #{tpu_custom_call.1} parent=1 // pred_region
      %v126 = vld [vmem:[#allocation2] sm:$0x3]
      %vm127 = vcmask 1041408
      %v128 = vsel %vm127, %v126, 0.0
      %129 = vadd.xlane.f32.xlu0 %v128
      %v130 = vpop.xlane.xlu0 %129
      %vm131 = vcmask 1024
      %132 = vst.msk [vmem:[%s2] sm:$0x3] %vm131, %v130
      %v133 = vld [vmem:[#allocation3] sm:$0x3]
      %v134 = vsel %vm127, %v133, 0.0
      %135 = vadd.xlane.f32.xlu0 %v134
      %v136 = vpop.xlane.xlu0 %135
      %137 = vst.msk [vmem:[%s3] sm:$0x3] %vm131, %v136
    $region25: #{tpu_custom_call.1} parent=1 // pred_fallthru
      _
    // Predicated region
    $region26: #{tpu_custom_call.1} parent=1 // pred_check
      _
    $region27: #{tpu_custom_call.1} parent=1 // pred_check_branch
      %139 = sbr.rel (0) target = $region29
    $region28: #{tpu_custom_call.1} parent=1 // pred_region
      _
    $region29: #{tpu_custom_call.1} parent=1 // pred_fallthru
      _
    // Predicated region
    $region30: #{tpu_custom_call.1} parent=1 // pred_check
      _
    $region31: #{tpu_custom_call.1} parent=1 // pred_check_branch
      %141 = sbr.rel (0) target = $region33
    $region32: #{tpu_custom_call.1} parent=1 // pred_region
      _
    $region33: #{tpu_custom_call.1} parent=1 // pred_fallthru
      _
    // Predicated region
    $region34: #{tpu_custom_call.1} parent=1 // pred_check
      _
    $region35: #{tpu_custom_call.1} parent=1 // pred_check_branch
      %143 = sbr.rel (0) target = $region37
    $region36: #{tpu_custom_call.1} parent=1 // pred_region
      _
    $region37: #{tpu_custom_call.1} parent=1 // pred_fallthru
      _
    // Predicated region
    $region38: #{tpu_custom_call.1} parent=1 // pred_check
      _
    $region39: #{tpu_custom_call.1} parent=1 // pred_check_branch
      %145 = sbr.rel (0) target = $region41
    $region40: #{tpu_custom_call.1} parent=1 // pred_region
      _
    $region41: #{tpu_custom_call.1} parent=1 // pred_fallthru
      _
    %146 = vsyncpa [#allocation5], 1
    %147 = vsyncpa [#allocation7], 1

</llo_original>
